<compile_context>
chip_gen: v5e
topology: v5e:2x2
jax: 0.10.0
libtpu: 0.0.40
codegen_flags: <defaults>
</compile_context>

<pallas_src>
import jax
import jax.numpy as jnp
from jax.experimental import pallas as pl
from jax.experimental.pallas import tpu as pltpu

# logical sizes (from the PyTorch module)
HID1 = 64          # metadata hidden 1
HID2 = 32          # metadata hidden 2 (meta feature width)
IMG_IN = 512       # resnet18 pooled feature width
IMG_FEAT = 128     # image fc output width
NUM_CLASSES = 2

# padded sizes
H1P = 128          # metadata hidden-1 pad (lane-dense intermediates; weights are tiny/resident)
H2P = 128          # metadata hidden-2 pad
OUT_PAD = 8        # classifier output pad (2 real classes) -> tiny HBM writeback


def _round_up(x, m):
    return ((x + m - 1) // m) * m


def _pad2d(a, rows, cols):
    return jnp.pad(a, ((0, rows - a.shape[0]), (0, cols - a.shape[1])))


def _pick_block_b(B):
    """Batch-tile heuristic: 16-row alignment, tiles <= 512 rows, >=2 even grid steps when
    the batch allows (both v7x TensorCores), bounded padding waste."""
    b16 = _round_up(max(B, 1), 16)
    if b16 <= 32:
        return b16                                   # single tiny tile
    steps = max(2, 2 * pl.cdiv(b16, 1024))           # even step count, tiles capped at 512
    return min(512, _round_up(pl.cdiv(b16, steps), 16))


def _fused_kernel(meta_ref, img_ref,
                  w1_ref, b1_ref, w2_ref, b2_ref,
                  wfold_ref, wcm_ref, bfold_ref,
                  o_ref):
    f32 = jnp.float32

    # --- metadata MLP (f32 operands: exact categorical IDs, tiny K so MXU cost is irrelevant) ---
    h = jnp.dot(meta_ref[...], w1_ref[...], preferred_element_type=f32)
    h = jnp.maximum(h + b1_ref[...], 0.0)
    m = jnp.dot(h, w2_ref[...], preferred_element_type=f32)
    m = jnp.maximum(m + b2_ref[...], 0.0)

    # --- image path folded into classifier: img @ (W_img @ Wc_img), bf16 operands, f32 acc ---
    y = jnp.dot(img_ref[...], wfold_ref[...], preferred_element_type=f32)

    # --- classifier meta half + fused bias ---
    y = y + jnp.dot(m, wcm_ref[...], preferred_element_type=f32)
    y = y + bfold_ref[...]

    o_ref[...] = y.astype(o_ref.dtype)


def multimodal_forward(metadata, img_feat512, params, *, block_b=None,
                       image_compute_dtype=jnp.bfloat16):
    """Fused forward of MultimodalModel (minus the untranslated resnet18 conv backbone).

    metadata:    (B, F)   float  - metadata columns (4 categorical + 3 numerical)
    img_feat512: (B, 512) float  - resnet18 pooled features (backbone output)
    params: dict with w1 (F,64), b1 (64,), w2 (64,32), b2 (32,),
                      w_img (512,128), b_img (128,), w_cls (160,2), b_cls (2,)
    returns logits (B, 2) float32
    """
    B, F = metadata.shape
    assert img_feat512.shape == (B, IMG_IN)

    if block_b is None:
        block_b = _pick_block_b(B)
    Bp = _round_up(B, block_b)
    grid = (Bp // block_b,)

    f32 = jnp.float32
    cdt = image_compute_dtype

    # Metadata stays narrow (8 f32 columns) in HBM — no 128-lane padding of the input stream.
    Fp = _round_up(F, 8)
    meta_p = _pad2d(metadata.astype(f32), Bp, Fp)
    # Image features are the dominant HBM stream: bf16 halves their traffic.
    img_p = _pad2d(img_feat512.astype(cdt), Bp, IMG_IN)

    # Metadata MLP weights: zero-pad to lane-dense hidden widths (tiny, resident in VMEM).
    # Semantics preserved: padded columns see zero weight + zero bias (ReLU(0)=0) and the padded
    # rows of the next matrix are zero; padded output columns are zero and sliced off below.
    w1 = _pad2d(params["w1"].astype(f32), Fp, H1P)
    b1 = _pad2d(params["b1"].reshape(1, -1).astype(f32), 1, H1P)
    w2 = _pad2d(params["w2"].astype(f32), H1P, H2P)
    b2 = _pad2d(params["b2"].reshape(1, -1).astype(f32), 1, H2P)

    # Fold the purely linear image fc head into the classifier (no activation between them
    # in the PyTorch module): img @ W_img @ Wc_img + b_img @ Wc_img  ==  img @ W_fold + <part of b_fold>.
    wc_img = params["w_cls"][:IMG_FEAT].astype(f32)                       # (128, 2)
    wc_meta = params["w_cls"][IMG_FEAT:].astype(f32)                      # (32, 2)
    w_fold = params["w_img"].astype(f32) @ wc_img                         # (512, 2), folded in f32
    b_fold = params["b_img"].astype(f32) @ wc_img + params["b_cls"].astype(f32)   # (2,)

    w_fold_p = _pad2d(w_fold, IMG_IN, OUT_PAD).astype(cdt)                # (512, 8) bf16
    wc_meta_p = _pad2d(wc_meta, H2P, OUT_PAD)                             # (128, 8) f32
    b_fold_p = _pad2d(b_fold.reshape(1, -1), 1, OUT_PAD)                  # (1, 8)   f32

    row = lambda i: (i, 0)     # batch-tiled operands
    const = lambda i: (0, 0)   # weights/biases: same block every step -> stay resident in VMEM

    out = pl.pallas_call(
        _fused_kernel,
        out_shape=jax.ShapeDtypeStruct((Bp, OUT_PAD), jnp.float32),
        grid_spec=pltpu.PrefetchScalarGridSpec(
            num_scalar_prefetch=0,
            grid=grid,
            in_specs=[
                pl.BlockSpec((block_b, Fp), row),         # metadata tile (f32, narrow)
                pl.BlockSpec((block_b, IMG_IN), row),     # image pooled-feature tile (bf16)
                pl.BlockSpec((Fp, H1P), const),           # W1
                pl.BlockSpec((1, H1P), const),            # b1
                pl.BlockSpec((H1P, H2P), const),          # W2
                pl.BlockSpec((1, H2P), const),            # b2
                pl.BlockSpec((IMG_IN, OUT_PAD), const),   # W_fold = W_img @ W_cls[:128]
                pl.BlockSpec((H2P, OUT_PAD), const),      # W_cls (meta half)
                pl.BlockSpec((1, OUT_PAD), const),        # b_fold
            ],
            out_specs=pl.BlockSpec((block_b, OUT_PAD), row),
        ),
        compiler_params=pltpu.CompilerParams(
            dimension_semantics=("parallel",),
        ),
    )(meta_p, img_p, w1, b1, w2, b2, w_fold_p, wc_meta_p, b_fold_p)

    # (Bp, 8) slab -> the real (B, 2) logits.
    return out[:B, :NUM_CLASSES]


def _init_params(key, input_size):
    """Deterministic init mimicking nn.Linear default (uniform +/- 1/sqrt(fan_in))."""
    ks = jax.random.split(key, 8)

    def lin(kw, kb, fan_in, fan_out):
        bound = 1.0 / jnp.sqrt(fan_in)
        w = jax.random.uniform(kw, (fan_in, fan_out), jnp.float32, -bound, bound)
        b = jax.random.uniform(kb, (fan_out,), jnp.float32, -bound, bound)
        return w, b

    w1, b1 = lin(ks[0], ks[1], input_size, HID1)
    w2, b2 = lin(ks[2], ks[3], HID1, HID2)
    w_img, b_img = lin(ks[4], ks[5], IMG_IN, IMG_FEAT)
    w_cls, b_cls = lin(ks[6], ks[7], IMG_FEAT + HID2, NUM_CLASSES)
    return dict(w1=w1, b1=b1, w2=w2, b2=b2, w_img=w_img, b_img=b_img,
                w_cls=w_cls, b_cls=b_cls)


def _ref_forward(metadata, img_feat512, p):
    """Pure-f32 PyTorch-equivalent math."""
    h = jnp.maximum(metadata @ p["w1"] + p["b1"], 0.0)
    m = jnp.maximum(h @ p["w2"] + p["b2"], 0.0)
    g = img_feat512 @ p["w_img"] + p["b_img"]
    combined = jnp.concatenate([g, m], axis=1)
    return combined @ p["w_cls"] + p["b_cls"]


def _kernel_numerics_ref(metadata, img_feat512, p):
    """Reference mirroring the kernel's numerics (folded image head, bf16 image operands,
    f32 metadata path, f32 accumulation) for a tight correctness check."""
    f32 = jnp.float32
    bf16 = jnp.bfloat16
    h = jnp.maximum(metadata @ p["w1"] + p["b1"], 0.0)
    m = jnp.maximum(h @ p["w2"] + p["b2"], 0.0)
    wc_img = p["w_cls"][:IMG_FEAT]
    wc_meta = p["w_cls"][IMG_FEAT:]
    w_fold = (p["w_img"] @ wc_img).astype(bf16).astype(f32)
    b_fold = p["b_img"] @ wc_img + p["b_cls"]
    y_img = img_feat512.astype(bf16).astype(f32) @ w_fold
    return y_img + m @ wc_meta + b_fold


if __name__ == "__main__":
    key = jax.random.PRNGKey(0)
    kx, ki, kp = jax.random.split(key, 3)

    # Small shapes consistent with the module: 4 categorical + 3 numerical metadata columns.
    batch, input_size = 8, 7
    metadata = jax.random.normal(kx, (batch, input_size), jnp.float32)
    # TODO(synk): stand-in for the untranslated resnet18 backbone's pooled 512-d output.
    img_feat512 = jax.random.normal(ki, (batch, IMG_IN), jnp.float32)
    params = _init_params(kp, input_size)

    logits = multimodal_forward(metadata, img_feat512, params)
    logits = jax.block_until_ready(logits)
    assert logits.shape == (batch, NUM_CLASSES)

    # Tight check against a reference that uses the same folded / bf16-image numerics.
    ref_k = _kernel_numerics_ref(metadata, img_feat512, params)
    assert jnp.allclose(logits, ref_k, atol=2e-3, rtol=2e-3), \
        float(jnp.max(jnp.abs(logits - ref_k)))

    # Loose check against pure-f32 PyTorch-equivalent math.
    ref_f32 = _ref_forward(metadata, img_feat512, params)
    assert jnp.allclose(logits, ref_f32, atol=5e-2, rtol=5e-2), \
        float(jnp.max(jnp.abs(logits - ref_f32)))

    print("KERNEL_OK")
</pallas_src>

<mosaic_0001>
module attributes {stable_mosaic.version = 11 : i64} {
  func.func @_fused_kernel(%arg0: i32, %arg1: memref<16x8xf32, #tpu.memory_space<vmem>>, %arg2: memref<16x512xbf16, #tpu.memory_space<vmem>>, %arg3: memref<8x128xf32, #tpu.memory_space<vmem>>, %arg4: memref<1x128xf32, #tpu.memory_space<vmem>>, %arg5: memref<128x128xf32, #tpu.memory_space<vmem>>, %arg6: memref<1x128xf32, #tpu.memory_space<vmem>>, %arg7: memref<512x8xbf16, #tpu.memory_space<vmem>>, %arg8: memref<128x8xf32, #tpu.memory_space<vmem>>, %arg9: memref<1x8xf32, #tpu.memory_space<vmem>>, %arg10: memref<16x8xf32, #tpu.memory_space<vmem>>) attributes {dimension_semantics = [#tpu.dimension_semantics<parallel>], iteration_bounds = array<i64: 1>, scalar_prefetch = 0 : i64, scratch_operands = 0 : i64, tpu.core_type = #tpu.core_type<tc>, window_params = [{transform_indices = @transform_0, window_bounds = array<i64: 16, 8>}, {transform_indices = @transform_1, window_bounds = array<i64: 16, 512>}, {pipeline_mode = #tpu.pipeline_mode<synchronous>, transform_indices = @transform_2, window_bounds = array<i64: 8, 128>}, {pipeline_mode = #tpu.pipeline_mode<synchronous>, transform_indices = @transform_3, window_bounds = array<i64: 1, 128>}, {pipeline_mode = #tpu.pipeline_mode<synchronous>, transform_indices = @transform_4, window_bounds = array<i64: 128, 128>}, {pipeline_mode = #tpu.pipeline_mode<synchronous>, transform_indices = @transform_5, window_bounds = array<i64: 1, 128>}, {pipeline_mode = #tpu.pipeline_mode<synchronous>, transform_indices = @transform_6, window_bounds = array<i64: 512, 8>}, {pipeline_mode = #tpu.pipeline_mode<synchronous>, transform_indices = @transform_7, window_bounds = array<i64: 128, 8>}, {pipeline_mode = #tpu.pipeline_mode<synchronous>, transform_indices = @transform_8, window_bounds = array<i64: 1, 8>}, {transform_indices = @transform_9, window_bounds = array<i64: 16, 8>}]} {
    %c0 = arith.constant 0 : index
    %c0_0 = arith.constant 0 : index
    %0 = vector.load %arg1[%c0, %c0_0] : memref<16x8xf32, #tpu.memory_space<vmem>>, vector<16x8xf32>
    %c0_1 = arith.constant 0 : index
    %c0_2 = arith.constant 0 : index
    %1 = vector.load %arg3[%c0_1, %c0_2] : memref<8x128xf32, #tpu.memory_space<vmem>>, vector<8x128xf32>
    %cst = arith.constant dense<0.000000e+00> : vector<16x128xf32>
    %2 = tpu.matmul %0, %1, %cst {dimension_numbers = #tpu.dot_dimension_numbers<[1], [0], [0], [1], [0, 0, 1, 1], [], []>} : vector<16x8xf32>, vector<8x128xf32>, vector<16x128xf32> -> vector<16x128xf32>
    %c0_3 = arith.constant 0 : index
    %c0_4 = arith.constant 0 : index
    %3 = vector.load %arg4[%c0_3, %c0_4] : memref<1x128xf32, #tpu.memory_space<vmem>>, vector<1x128xf32>
    %4 = vector.broadcast %3 : vector<1x128xf32> to vector<16x128xf32>
    %5 = arith.addf %2, %4 : vector<16x128xf32>
    %cst_5 = arith.constant 0.000000e+00 : f32
    %6 = vector.broadcast %cst_5 : f32 to vector<16x128xf32>
    %7 = arith.maximumf %5, %6 : vector<16x128xf32>
    %c0_6 = arith.constant 0 : index
    %c0_7 = arith.constant 0 : index
    %8 = vector.load %arg5[%c0_6, %c0_7] : memref<128x128xf32, #tpu.memory_space<vmem>>, vector<128x128xf32>
    %cst_8 = arith.constant dense<0.000000e+00> : vector<16x128xf32>
    %9 = tpu.matmul %7, %8, %cst_8 {dimension_numbers = #tpu.dot_dimension_numbers<[1], [0], [0], [1], [0, 0, 1, 1], [], []>} : vector<16x128xf32>, vector<128x128xf32>, vector<16x128xf32> -> vector<16x128xf32>
    %c0_9 = arith.constant 0 : index
    %c0_10 = arith.constant 0 : index
    %10 = vector.load %arg6[%c0_9, %c0_10] : memref<1x128xf32, #tpu.memory_space<vmem>>, vector<1x128xf32>
    %11 = vector.broadcast %10 : vector<1x128xf32> to vector<16x128xf32>
    %12 = arith.addf %9, %11 : vector<16x128xf32>
    %cst_11 = arith.constant 0.000000e+00 : f32
    %13 = vector.broadcast %cst_11 : f32 to vector<16x128xf32>
    %14 = arith.maximumf %12, %13 : vector<16x128xf32>
    %c0_12 = arith.constant 0 : index
    %c0_13 = arith.constant 0 : index
    %15 = vector.load %arg2[%c0_12, %c0_13] : memref<16x512xbf16, #tpu.memory_space<vmem>>, vector<16x512xbf16>
    %c0_14 = arith.constant 0 : index
    %c0_15 = arith.constant 0 : index
    %16 = vector.load %arg7[%c0_14, %c0_15] : memref<512x8xbf16, #tpu.memory_space<vmem>>, vector<512x8xbf16>
    %cst_16 = arith.constant dense<0.000000e+00> : vector<16x8xf32>
    %17 = tpu.matmul %15, %16, %cst_16 {dimension_numbers = #tpu.dot_dimension_numbers<[1], [0], [0], [1], [0, 0, 1, 1], [], []>} : vector<16x512xbf16>, vector<512x8xbf16>, vector<16x8xf32> -> vector<16x8xf32>
    %c0_17 = arith.constant 0 : index
    %c0_18 = arith.constant 0 : index
    %18 = vector.load %arg8[%c0_17, %c0_18] : memref<128x8xf32, #tpu.memory_space<vmem>>, vector<128x8xf32>
    %cst_19 = arith.constant dense<0.000000e+00> : vector<16x8xf32>
    %19 = tpu.matmul %14, %18, %cst_19 {dimension_numbers = #tpu.dot_dimension_numbers<[1], [0], [0], [1], [0, 0, 1, 1], [], []>} : vector<16x128xf32>, vector<128x8xf32>, vector<16x8xf32> -> vector<16x8xf32>
    %20 = arith.addf %17, %19 : vector<16x8xf32>
    %c0_20 = arith.constant 0 : index
    %c0_21 = arith.constant 0 : index
    %21 = vector.load %arg9[%c0_20, %c0_21] : memref<1x8xf32, #tpu.memory_space<vmem>>, vector<1x8xf32>
    %22 = vector.broadcast %21 : vector<1x8xf32> to vector<16x8xf32>
    %23 = arith.addf %20, %22 : vector<16x8xf32>
    %c0_22 = arith.constant 0 : index
    %c0_23 = arith.constant 0 : index
    %24 = vector.load %arg10[%c0_22, %c0_23] : memref<16x8xf32, #tpu.memory_space<vmem>>, vector<16x8xf32>
    tpu.vector_store %arg10[%c0_22, %c0_23], %23 {strides = array<i32>} : memref<16x8xf32, #tpu.memory_space<vmem>>, vector<16x8xf32>,
    return
  }
  func.func @transform_0(%arg0: i32) -> (i32, i32) {
    %c0_i32 = arith.constant 0 : i32
    %c0_i32_0 = arith.constant 0 : i32
    return %arg0, %c0_i32 : i32, i32
  }
  func.func @transform_1(%arg0: i32) -> (i32, i32) {
    %c0_i32 = arith.constant 0 : i32
    %c0_i32_0 = arith.constant 0 : i32
    return %arg0, %c0_i32 : i32, i32
  }
  func.func @transform_2(%arg0: i32) -> (i32, i32) {
    %c0_i32 = arith.constant 0 : i32
    %c0_i32_0 = arith.constant 0 : i32
    %c0_i32_1 = arith.constant 0 : i32
    return %c0_i32, %c0_i32_0 : i32, i32
  }
  func.func @transform_3(%arg0: i32) -> (i32, i32) {
    %c0_i32 = arith.constant 0 : i32
    %c0_i32_0 = arith.constant 0 : i32
    %c0_i32_1 = arith.constant 0 : i32
    return %c0_i32, %c0_i32_0 : i32, i32
  }
  func.func @transform_4(%arg0: i32) -> (i32, i32) {
    %c0_i32 = arith.constant 0 : i32
    %c0_i32_0 = arith.constant 0 : i32
    %c0_i32_1 = arith.constant 0 : i32
    return %c0_i32, %c0_i32_0 : i32, i32
  }
  func.func @transform_5(%arg0: i32) -> (i32, i32) {
    %c0_i32 = arith.constant 0 : i32
    %c0_i32_0 = arith.constant 0 : i32
    %c0_i32_1 = arith.constant 0 : i32
    return %c0_i32, %c0_i32_0 : i32, i32
  }
  func.func @transform_6(%arg0: i32) -> (i32, i32) {
    %c0_i32 = arith.constant 0 : i32
    %c0_i32_0 = arith.constant 0 : i32
    %c0_i32_1 = arith.constant 0 : i32
    return %c0_i32, %c0_i32_0 : i32, i32
  }
  func.func @transform_7(%arg0: i32) -> (i32, i32) {
    %c0_i32 = arith.constant 0 : i32
    %c0_i32_0 = arith.constant 0 : i32
    %c0_i32_1 = arith.constant 0 : i32
    return %c0_i32, %c0_i32_0 : i32, i32
  }
  func.func @transform_8(%arg0: i32) -> (i32, i32) {
    %c0_i32 = arith.constant 0 : i32
    %c0_i32_0 = arith.constant 0 : i32
    %c0_i32_1 = arith.constant 0 : i32
    return %c0_i32, %c0_i32_0 : i32, i32
  }
  func.func @transform_9(%arg0: i32) -> (i32, i32) {
    %c0_i32 = arith.constant 0 : i32
    %c0_i32_0 = arith.constant 0 : i32
    return %arg0, %c0_i32 : i32, i32
  }
}

</mosaic_0001>

<llo_original>
// kernel: tpu_custom_call.1
$region0: #{tpu_custom_call.1}
  #allocation0 [shape = 'u32[]', space=smem, size = 0x4, offset = 0x4, fixed_abs, tag = 'smem constant byte address 0x4 - core index']
  #allocation1 [shape = 'u32[72,128]{1,0:T(1,128)}', space=vmem, size = 0x9000, scoped, tag = 'internal scratch']
  %s0 = inlined_call_operand.vmem [shape: f32[16,8], index: 0, kind: input, shape index: {}]
  %s1 = inlined_call_operand.vmem [shape: bf16[16,512], index: 1, kind: input, shape index: {}]
  %s2 = inlined_call_operand.vmem [shape: f32[8,128], index: 2, kind: input, shape index: {}]
  %s3 = inlined_call_operand.vmem [shape: f32[1,128], index: 3, kind: input, shape index: {}]
  %s4 = inlined_call_operand.vmem [shape: f32[128,128], index: 4, kind: input, shape index: {}]
  %s5 = inlined_call_operand.vmem [shape: f32[1,128], index: 5, kind: input, shape index: {}]
  %s6 = inlined_call_operand.vmem [shape: bf16[512,8], index: 6, kind: input, shape index: {}]
  %s7 = inlined_call_operand.vmem [shape: f32[128,8], index: 7, kind: input, shape index: {}]
  %s8 = inlined_call_operand.vmem [shape: f32[1,8], index: 8, kind: input, shape index: {}]
  %s9 = inlined_call_operand.vmem [shape: f32[16,8], index: 9, kind: output, shape index: {}]
  %s10 = sld [smem:[#allocation0]]
  $region46: #{tpu_custom_call.1} parent=0
    _
  %s12 = ssub.s32 1, %s10
  %s13 = scalar_select 0, %s12, %s10
  // Predicated region
  $region2: #{tpu_custom_call.1} parent=0 // pred_check
    _
  $region3: #{tpu_custom_call.1} parent=0 // pred_check_branch
    %15 = sbr.rel (0) target = $region5
  $region4: #{tpu_custom_call.1} parent=0 // pred_region
    _
  $region5: #{tpu_custom_call.1} parent=0 // pred_fallthru
    _
  // Predicated region
  $region6: #{tpu_custom_call.1} parent=0 // pred_check
    _
  $region7: #{tpu_custom_call.1} parent=0 // pred_check_branch
    %17 = sbr.rel (0) target = $region9
  $region8: #{tpu_custom_call.1} parent=0 // pred_region
    _
  $region9: #{tpu_custom_call.1} parent=0 // pred_fallthru
    _
  // Predicated region
  $region10: #{tpu_custom_call.1} parent=0 // pred_check
    _
  $region11: #{tpu_custom_call.1} parent=0 // pred_check_branch
    %19 = sbr.rel (0) target = $region13
  $region12: #{tpu_custom_call.1} parent=0 // pred_region
    _
  $region13: #{tpu_custom_call.1} parent=0 // pred_fallthru
    _
  // Predicated region
  $region14: #{tpu_custom_call.1} parent=0 // pred_check
    _
  $region15: #{tpu_custom_call.1} parent=0 // pred_check_branch
    %21 = sbr.rel (0) target = $region17
  $region16: #{tpu_custom_call.1} parent=0 // pred_region
    _
  $region17: #{tpu_custom_call.1} parent=0 // pred_fallthru
    _
  // Predicated region
  $region18: #{tpu_custom_call.1} parent=0 // pred_check
    _
  $region19: #{tpu_custom_call.1} parent=0 // pred_check_branch
    %23 = sbr.rel (0) target = $region21
  $region20: #{tpu_custom_call.1} parent=0 // pred_region
    _
  $region21: #{tpu_custom_call.1} parent=0 // pred_fallthru
    _
  // Predicated region
  $region22: #{tpu_custom_call.1} parent=0 // pred_check
    _
  $region23: #{tpu_custom_call.1} parent=0 // pred_check_branch
    %25 = sbr.rel (0) target = $region25
  $region24: #{tpu_custom_call.1} parent=0 // pred_region
    _
  $region25: #{tpu_custom_call.1} parent=0 // pred_fallthru
    _
  // Predicated region
  $region26: #{tpu_custom_call.1} parent=0 // pred_check
    _
  $region27: #{tpu_custom_call.1} parent=0 // pred_check_branch
    %27 = sbr.rel (0) target = $region29
  $region28: #{tpu_custom_call.1} parent=0 // pred_region
    _
  $region29: #{tpu_custom_call.1} parent=0 // pred_fallthru
    _
  // Predicated region
  $region30: #{tpu_custom_call.1} parent=0 // pred_check
    _
  $region31: #{tpu_custom_call.1} parent=0 // pred_check_branch
    %29 = sbr.rel (0) target = $region33
  $region32: #{tpu_custom_call.1} parent=0 // pred_region
    _
  $region33: #{tpu_custom_call.1} parent=0 // pred_fallthru
    _
  // Predicated region
  $region34: #{tpu_custom_call.1} parent=0 // pred_check
    _
  $region35: #{tpu_custom_call.1} parent=0 // pred_check_branch
    %31 = sbr.rel (0) target = $region37
  $region36: #{tpu_custom_call.1} parent=0 // pred_region
    _
  $region37: #{tpu_custom_call.1} parent=0 // pred_fallthru
    _
  %v32 = vld [vmem:[%s0] sm:$0xff]
  %v33 = vld [vmem:[%s0 + $0x8] sm:$0xff]
  %v34 = vld [vmem:[%s2] sm:$0xff]
  %v35 = vld [vmem:[%s3] sm:$0x1]
  %v37 = vperm.slane %v35, 0
  %vm39 = vcmask 64512
  %v41 = vsel %vm39, %v32, 0
  %v44 = vsel %vm39, %v33, 0
  %46 = vmatpush.msra.mxu0 0.0
  %47 = vmatpush.msra.mxu0 0.0
  %48 = vmatpush.msra.mxu0 0.0
  %49 = vmatpush.msra.mxu0 0.0
  %50 = vmatpush.msra.mxu0 0.0
  %51 = vmatpush.msra.mxu0 0.0
  %52 = vmatpush.msra.mxu0 0.0
  %53 = vmatpush.msra.mxu0 0.0
  %54 = vmatpush.msra.mxu0 0.0
  %55 = vmatpush.msra.mxu0 0.0
  %56 = vmatpush.msra.mxu0 0.0
  %57 = vmatpush.msra.mxu0 0.0
  %58 = vmatpush.msra.mxu0 0.0
  %59 = vmatpush.msra.mxu0 0.0
  %60 = vmatpush.msra.mxu0 0.0
  %61 = vmatpush.msra.mxu0 %v34
  %62 = vmatmul.f32.gmra.mxu0 %v41
  %v63 = vpop.f32.mrf.mxu0
  %v64 = vadd.f32 %v37, %v63
  %65 = vmatmul.f32.gmra.mxu0 %v44
  %v66 = vpop.f32.mrf.mxu0
  %v67 = vadd.f32 %v37, %v66
  %68 = vdwg.mxu0
  %v69 = vmax.f32 %v64, 0.0
  %v70 = vmax.f32 %v67, 0.0
  %v71 = vld [vmem:[%s4] sm:$0xff]
  %v72 = vld [vmem:[%s4 + $0x8] sm:$0xff]
  %v73 = vld [vmem:[%s4 + $0x10] sm:$0xff]
  %v74 = vld [vmem:[%s4 + $0x18] sm:$0xff]
  %v75 = vld [vmem:[%s4 + $0x20] sm:$0xff]
  %v76 = vld [vmem:[%s4 + $0x28] sm:$0xff]
  %v77 = vld [vmem:[%s4 + $0x30] sm:$0xff]
  %v78 = vld [vmem:[%s4 + $0x38] sm:$0xff]
  %v79 = vld [vmem:[%s4 + $0x40] sm:$0xff]
  %v80 = vld [vmem:[%s4 + $0x48] sm:$0xff]
  %v81 = vld [vmem:[%s4 + $0x50] sm:$0xff]
  %v82 = vld [vmem:[%s4 + $0x58] sm:$0xff]
  %v83 = vld [vmem:[%s4 + $0x60] sm:$0xff]
  %v84 = vld [vmem:[%s4 + $0x68] sm:$0xff]
  %v85 = vld [vmem:[%s4 + $0x70] sm:$0xff]
  %v86 = vld [vmem:[%s4 + $0x78] sm:$0xff]
  %v87 = vld [vmem:[%s5] sm:$0x1]
  %v89 = vperm.slane %v87, 0
  %91 = vmatpush.msra.mxu0 %v86
  %92 = vmatpush.msra.mxu0 %v85
  %93 = vmatpush.msra.mxu0 %v84
  %94 = vmatpush.msra.mxu0 %v83
  %95 = vmatpush.msra.mxu0 %v82
  %96 = vmatpush.msra.mxu0 %v81
  %97 = vmatpush.msra.mxu0 %v80
  %98 = vmatpush.msra.mxu0 %v79
  %99 = vmatpush.msra.mxu0 %v78
  %100 = vmatpush.msra.mxu0 %v77
  %101 = vmatpush.msra.mxu0 %v76
  %102 = vmatpush.msra.mxu0 %v75
  %103 = vmatpush.msra.mxu0 %v74
  %104 = vmatpush.msra.mxu0 %v73
  %105 = vmatpush.msra.mxu0 %v72
  %106 = vmatpush.msra.mxu0 %v71
  %107 = vmatmul.f32.gmra.mxu0 %v69
  %v108 = vpop.f32.mrf.mxu0
  %v109 = vadd.f32 %v89, %v108
  %110 = vmatmul.f32.gmra.mxu0 %v70
  %v111 = vpop.f32.mrf.mxu0
  %v112 = vadd.f32 %v89, %v111
  %113 = vdwg.mxu0
  %v114 = vmax.f32 %v109, 0.0
  %v115 = vmax.f32 %v112, 0.0
  %v116 = vld [vmem:[%s1] sm:$0xff]
  %v117 = vld [vmem:[%s1 + $0x8] sm:$0xff]
  %v118 = vld [vmem:[%s1 + $0x10] sm:$0xff]
  %v119 = vld [vmem:[%s1 + $0x18] sm:$0xff]
  %v120 = vld [vmem:[%s6] sm:$0xf]
  %v121 = vld [vmem:[%s6 + $0x4] sm:$0xf]
  %v122 = vld [vmem:[%s6 + $0x8] sm:$0xf]
  %v123 = vld [vmem:[%s6 + $0xc] sm:$0xf]
  %v124 = vld [vmem:[%s6 + $0x10] sm:$0xf]
  %v125 = vld [vmem:[%s6 + $0x14] sm:$0xf]
  %v126 = vld [vmem:[%s6 + $0x18] sm:$0xf]
  %v127 = vld [vmem:[%s6 + $0x1c] sm:$0xf]
  %v128 = vld [vmem:[%s6 + $0x20] sm:$0xf]
  %v129 = vld [vmem:[%s6 + $0x24] sm:$0xf]
  %v130 = vld [vmem:[%s6 + $0x28] sm:$0xf]
  %v131 = vld [vmem:[%s6 + $0x2c] sm:$0xf]
  %v132 = vld [vmem:[%s6 + $0x30] sm:$0xf]
  %v133 = vld [vmem:[%s6 + $0x34] sm:$0xf]
  %v134 = vld [vmem:[%s6 + $0x38] sm:$0xf]
  %v135 = vld [vmem:[%s6 + $0x3c] sm:$0xf]
  %v136 = vld [vmem:[%s6 + $0x40] sm:$0xf]
  %v137 = vld [vmem:[%s6 + $0x44] sm:$0xf]
  %v138 = vld [vmem:[%s6 + $0x48] sm:$0xf]
  %v139 = vld [vmem:[%s6 + $0x4c] sm:$0xf]
  %v140 = vld [vmem:[%s6 + $0x50] sm:$0xf]
  %v141 = vld [vmem:[%s6 + $0x54] sm:$0xf]
  %v142 = vld [vmem:[%s6 + $0x58] sm:$0xf]
  %v143 = vld [vmem:[%s6 + $0x5c] sm:$0xf]
  %v144 = vld [vmem:[%s6 + $0x60] sm:$0xf]
  %v145 = vld [vmem:[%s6 + $0x64] sm:$0xf]
  %v146 = vld [vmem:[%s6 + $0x68] sm:$0xf]
  %v147 = vld [vmem:[%s6 + $0x6c] sm:$0xf]
  %v148 = vld [vmem:[%s6 + $0x70] sm:$0xf]
  %v149 = vld [vmem:[%s6 + $0x74] sm:$0xf]
  %v150 = vld [vmem:[%s6 + $0x78] sm:$0xf]
  %v151 = vld [vmem:[%s6 + $0x7c] sm:$0xf]
  %v152 = vld [vmem:[%s6 + $0x80] sm:$0xf]
  %v153 = vld [vmem:[%s6 + $0x84] sm:$0xf]
  %v154 = vld [vmem:[%s6 + $0x88] sm:$0xf]
  %v155 = vld [vmem:[%s6 + $0x8c] sm:$0xf]
  %v156 = vld [vmem:[%s6 + $0x90] sm:$0xf]
  %v157 = vld [vmem:[%s6 + $0x94] sm:$0xf]
  %v158 = vld [vmem:[%s6 + $0x98] sm:$0xf]
  %v159 = vld [vmem:[%s6 + $0x9c] sm:$0xf]
  %v160 = vld [vmem:[%s6 + $0xa0] sm:$0xf]
  %v161 = vld [vmem:[%s6 + $0xa4] sm:$0xf]
  %v162 = vld [vmem:[%s6 + $0xa8] sm:$0xf]
  %v163 = vld [vmem:[%s6 + $0xac] sm:$0xf]
  %v164 = vld [vmem:[%s6 + $0xb0] sm:$0xf]
  %v165 = vld [vmem:[%s6 + $0xb4] sm:$0xf]
  %v166 = vld [vmem:[%s6 + $0xb8] sm:$0xf]
  %v167 = vld [vmem:[%s6 + $0xbc] sm:$0xf]
  %v168 = vld [vmem:[%s6 + $0xc0] sm:$0xf]
  %v169 = vld [vmem:[%s6 + $0xc4] sm:$0xf]
  %v170 = vld [vmem:[%s6 + $0xc8] sm:$0xf]
  %v171 = vld [vmem:[%s6 + $0xcc] sm:$0xf]
  %v172 = vld [vmem:[%s6 + $0xd0] sm:$0xf]
  %v173 = vld [vmem:[%s6 + $0xd4] sm:$0xf]
  %v174 = vld [vmem:[%s6 + $0xd8] sm:$0xf]
  %v175 = vld [vmem:[%s6 + $0xdc] sm:$0xf]
  %v176 = vld [vmem:[%s6 + $0xe0] sm:$0xf]
  %v177 = vld [vmem:[%s6 + $0xe4] sm:$0xf]
  %v178 = vld [vmem:[%s6 + $0xe8] sm:$0xf]
  %v179 = vld [vmem:[%s6 + $0xec] sm:$0xf]
  %v180 = vld [vmem:[%s6 + $0xf0] sm:$0xf]
  %v181 = vld [vmem:[%s6 + $0xf4] sm:$0xf]
  %v182 = vld [vmem:[%s6 + $0xf8] sm:$0xf]
  %v183 = vld [vmem:[%s6 + $0xfc] sm:$0xf]
  %v184 = vld [vmem:[%s7] sm:$0xff]
  %v185 = vld [vmem:[%s7 + $0x8] sm:$0xff]
  %v186 = vld [vmem:[%s7 + $0x10] sm:$0xff]
  %v187 = vld [vmem:[%s7 + $0x18] sm:$0xff]
  %v188 = vld [vmem:[%s7 + $0x20] sm:$0xff]
  %v189 = vld [vmem:[%s7 + $0x28] sm:$0xff]
  %v190 = vld [vmem:[%s7 + $0x30] sm:$0xff]
  %v191 = vld [vmem:[%s7 + $0x38] sm:$0xff]
  %v192 = vld [vmem:[%s7 + $0x40] sm:$0xff]
  %v193 = vld [vmem:[%s7 + $0x48] sm:$0xff]
  %v194 = vld [vmem:[%s7 + $0x50] sm:$0xff]
  %v195 = vld [vmem:[%s7 + $0x58] sm:$0xff]
  %v196 = vld [vmem:[%s7 + $0x60] sm:$0xff]
  %v197 = vld [vmem:[%s7 + $0x68] sm:$0xff]
  %v198 = vld [vmem:[%s7 + $0x70] sm:$0xff]
  %v199 = vld [vmem:[%s7 + $0x78] sm:$0xff]
  %200 = vmatpush.msra.mxu0 %v199
  %201 = vmatpush.msra.mxu0 %v198
  %202 = vmatpush.msra.mxu0 %v197
  %203 = vmatpush.msra.mxu0 %v196
  %204 = vmatpush.msra.mxu0 %v195
  %205 = vmatpush.msra.mxu0 %v194
  %206 = vmatpush.msra.mxu0 %v193
  %207 = vmatpush.msra.mxu0 %v192
  %208 = vmatpush.msra.mxu0 %v191
  %209 = vmatpush.msra.mxu0 %v190
  %210 = vmatpush.msra.mxu0 %v189
  %211 = vmatpush.msra.mxu0 %v188
  %212 = vmatpush.msra.mxu0 %v187
  %213 = vmatpush.msra.mxu0 %v186
  %214 = vmatpush.msra.mxu0 %v185
  %215 = vmatpush.msra.mxu0 %v184
  %216 = vmatmul.f32.gmra.mxu0 %v114
  %v217 = vpop.f32.mrf.mxu0
  %v218 = vadd.f32 0.0, %v217
  %219 = vmatmul.f32.gmra.mxu0 %v115
  %v220 = vpop.f32.mrf.mxu0
  %v221 = vadd.f32 0.0, %v220
  %222 = vdwg.mxu0
  %v227 = vunpack.c.l.b16 %v116
  %v228 = vunpack.c.h.b16 %v116
  %v229 = vunpack.c.l.b16 %v117
  %v230 = vunpack.c.h.b16 %v117
  %v231 = vunpack.c.l.b16 %v118
  %v232 = vunpack.c.h.b16 %v118
  %v233 = vunpack.c.l.b16 %v119
  %v234 = vunpack.c.h.b16 %v119
  %v235 = vpack.c.b16 %v231, %v227
  %v236 = vpack.c.b16 %v232, %v228
  %v237 = vpack.c.b16 %v233, %v229
  %v238 = vpack.c.b16 %v234, %v230
  %v307 = vunpack.c.l.b16 %v120
  %v308 = vunpack.c.l.b16 %v121
  %v309 = vunpack.c.l.b16 %v122
  %v310 = vunpack.c.l.b16 %v123
  %v311 = vunpack.c.l.b16 %v124
  %v312 = vunpack.c.l.b16 %v125
  %v313 = vunpack.c.l.b16 %v126
  %v314 = vunpack.c.l.b16 %v127
  %v315 = vunpack.c.l.b16 %v128
  %v316 = vunpack.c.l.b16 %v129
  %v317 = vunpack.c.l.b16 %v130
  %v318 = vunpack.c.l.b16 %v131
  %v319 = vunpack.c.l.b16 %v132
  %v320 = vunpack.c.l.b16 %v133
  %v321 = vunpack.c.l.b16 %v134
  %v322 = vunpack.c.l.b16 %v135
  %v323 = vunpack.c.l.b16 %v136
  %v324 = vunpack.c.l.b16 %v137
  %v325 = vunpack.c.l.b16 %v138
  %v326 = vunpack.c.l.b16 %v139
  %v327 = vunpack.c.l.b16 %v140
  %v328 = vunpack.c.l.b16 %v141
  %v329 = vunpack.c.l.b16 %v142
  %v330 = vunpack.c.l.b16 %v143
  %v331 = vunpack.c.l.b16 %v144
  %v332 = vunpack.c.l.b16 %v145
  %v333 = vunpack.c.l.b16 %v146
  %v334 = vunpack.c.l.b16 %v147
  %v335 = vunpack.c.l.b16 %v148
  %v336 = vunpack.c.l.b16 %v149
  %v337 = vunpack.c.l.b16 %v150
  %v338 = vunpack.c.l.b16 %v151
  %v339 = vunpack.c.l.b16 %v152
  %v340 = vunpack.c.l.b16 %v153
  %v341 = vunpack.c.l.b16 %v154
  %v342 = vunpack.c.l.b16 %v155
  %v343 = vunpack.c.l.b16 %v156
  %v344 = vunpack.c.l.b16 %v157
  %v345 = vunpack.c.l.b16 %v158
  %v346 = vunpack.c.l.b16 %v159
  %v347 = vunpack.c.l.b16 %v160
  %v348 = vunpack.c.l.b16 %v161
  %v349 = vunpack.c.l.b16 %v162
  %v350 = vunpack.c.l.b16 %v163
  %v351 = vunpack.c.l.b16 %v164
  %v352 = vunpack.c.l.b16 %v165
  %v353 = vunpack.c.l.b16 %v166
  %v354 = vunpack.c.l.b16 %v167
  %v355 = vunpack.c.l.b16 %v168
  %v356 = vunpack.c.l.b16 %v169
  %v357 = vunpack.c.l.b16 %v170
  %v358 = vunpack.c.l.b16 %v171
  %v359 = vunpack.c.l.b16 %v172
  %v360 = vunpack.c.l.b16 %v173
  %v361 = vunpack.c.l.b16 %v174
  %v362 = vunpack.c.l.b16 %v175
  %v363 = vunpack.c.l.b16 %v176
  %v364 = vunpack.c.l.b16 %v177
  %v365 = vunpack.c.l.b16 %v178
  %v366 = vunpack.c.l.b16 %v179
  %v367 = vunpack.c.l.b16 %v180
  %v368 = vunpack.c.l.b16 %v181
  %v369 = vunpack.c.l.b16 %v182
  %v370 = vunpack.c.l.b16 %v183
  %v371 = vpack.c.b16 %v308, %v307
  %v372 = vpack.c.b16 %v310, %v309
  %v373 = vpack.c.b16 %v312, %v311
  %v374 = vpack.c.b16 %v314, %v313
  %v375 = vpack.c.b16 %v316, %v315
  %v376 = vpack.c.b16 %v318, %v317
  %v377 = vpack.c.b16 %v320, %v319
  %v378 = vpack.c.b16 %v322, %v321
  %v379 = vpack.c.b16 %v324, %v323
  %v380 = vpack.c.b16 %v326, %v325
  %v381 = vpack.c.b16 %v328, %v327
  %v382 = vpack.c.b16 %v330, %v329
  %v383 = vpack.c.b16 %v332, %v331
  %v384 = vpack.c.b16 %v334, %v333
  %v385 = vpack.c.b16 %v336, %v335
  %v386 = vpack.c.b16 %v338, %v337
  %v387 = vpack.c.b16 %v340, %v339
  %v388 = vpack.c.b16 %v342, %v341
  %v389 = vpack.c.b16 %v344, %v343
  %v390 = vpack.c.b16 %v346, %v345
  %v391 = vpack.c.b16 %v348, %v347
  %v392 = vpack.c.b16 %v350, %v349
  %v393 = vpack.c.b16 %v352, %v351
  %v394 = vpack.c.b16 %v354, %v353
  %v395 = vpack.c.b16 %v356, %v355
  %v396 = vpack.c.b16 %v358, %v357
  %v397 = vpack.c.b16 %v360, %v359
  %v398 = vpack.c.b16 %v362, %v361
  %v399 = vpack.c.b16 %v364, %v363
  %v400 = vpack.c.b16 %v366, %v365
  %v401 = vpack.c.b16 %v368, %v367
  %v402 = vpack.c.b16 %v370, %v369
  %435 = vmatpush.bf16.msra.mxu0 %v378
  %436 = vmatpush.bf16.msra.mxu0 %v377
  %437 = vmatpush.bf16.msra.mxu0 %v376
  %438 = vmatpush.bf16.msra.mxu0 %v375
  %439 = vmatpush.bf16.msra.mxu0 %v374
  %440 = vmatpush.bf16.msra.mxu0 %v373
  %441 = vmatpush.bf16.msra.mxu0 %v372
  %442 = vmatpush.bf16.msra.mxu0 %v371
  %443 = vmatmul.bf16.gmra.mxu0 %v235
  %v444 = vpop.f32.mrf.mxu0
  %v445 = vadd.f32 %v218, %v444
  %v446 = vpop.f32.mrf.mxu0
  %v447 = vadd.f32 %v221, %v446
  %448 = vdwg.mxu0
  %449 = vmatpush.bf16.msra.mxu0 %v386
  %450 = vmatpush.bf16.msra.mxu0 %v385
  %451 = vmatpush.bf16.msra.mxu0 %v384
  %452 = vmatpush.bf16.msra.mxu0 %v383
  %453 = vmatpush.bf16.msra.mxu0 %v382
  %454 = vmatpush.bf16.msra.mxu0 %v381
  %455 = vmatpush.bf16.msra.mxu0 %v380
  %456 = vmatpush.bf16.msra.mxu0 %v379
  %457 = vmatmul.bf16.gmra.mxu0 %v236
  %v458 = vpop.f32.mrf.mxu0
  %v459 = vadd.f32 %v445, %v458
  %v460 = vpop.f32.mrf.mxu0
  %v461 = vadd.f32 %v447, %v460
  %462 = vdwg.mxu0
  %463 = vmatpush.bf16.msra.mxu0 %v394
  %464 = vmatpush.bf16.msra.mxu0 %v393
  %465 = vmatpush.bf16.msra.mxu0 %v392
  %466 = vmatpush.bf16.msra.mxu0 %v391
  %467 = vmatpush.bf16.msra.mxu0 %v390
  %468 = vmatpush.bf16.msra.mxu0 %v389
  %469 = vmatpush.bf16.msra.mxu0 %v388
  %470 = vmatpush.bf16.msra.mxu0 %v387
  %471 = vmatmul.bf16.gmra.mxu0 %v237
  %v472 = vpop.f32.mrf.mxu0
  %v473 = vadd.f32 %v459, %v472
  %v474 = vpop.f32.mrf.mxu0
  %v475 = vadd.f32 %v461, %v474
  %476 = vdwg.mxu0
  %477 = vmatpush.bf16.msra.mxu0 %v402
  %478 = vmatpush.bf16.msra.mxu0 %v401
  %479 = vmatpush.bf16.msra.mxu0 %v400
  %480 = vmatpush.bf16.msra.mxu0 %v399
  %481 = vmatpush.bf16.msra.mxu0 %v398
  %482 = vmatpush.bf16.msra.mxu0 %v397
  %483 = vmatpush.bf16.msra.mxu0 %v396
  %484 = vmatpush.bf16.msra.mxu0 %v395
  %485 = vmatmul.bf16.gmra.mxu0 %v238
  %v486 = vpop.f32.mrf.mxu0
  %v487 = vadd.f32 %v473, %v486
  %v488 = vpop.f32.mrf.mxu0
  %v489 = vadd.f32 %v475, %v488
  %490 = vdwg.mxu0
  %v491 = vld [vmem:[%s8] sm:$0x1]
  %v493 = vperm.slane %v491, 0
  %v495 = vadd.f32 %v487, %v493
  %v496 = vadd.f32 %v489, %v493
  %497 = vst.msk [vmem:[%s9] sm:$0xff] %vm39, %v495
  %498 = vst.msk [vmem:[%s9 + $0x8] sm:$0xff] %vm39, %v496
  // Predicated region
  $region38: #{tpu_custom_call.1} parent=0 // pred_check
    _
  $region39: #{tpu_custom_call.1} parent=0 // pred_check_branch
    %500 = sbr.rel (0) target = $region41
  $region40: #{tpu_custom_call.1} parent=0 // pred_region
    _
  $region41: #{tpu_custom_call.1} parent=0 // pred_fallthru
    _
  // Predicated region
  $region42: #{tpu_custom_call.1} parent=0 // pred_check
    _
  $region43: #{tpu_custom_call.1} parent=0 // pred_check_branch
    %502 = sbr.rel (0) target = $region45
  $region44: #{tpu_custom_call.1} parent=0 // pred_region
    _
  $region45: #{tpu_custom_call.1} parent=0 // pred_fallthru
    _

</llo_original>
